<compile_context>
chip_gen: v6e
topology: v6e:2x2x1
jax: 0.10.0
libtpu: 0.0.40
codegen_flags: <defaults>
</compile_context>

<pallas_src>
import functools

import jax
import jax.numpy as jnp
from jax.experimental import pallas as pl
from jax.experimental.pallas import tpu as pltpu


def _layernorm_kernel(x_ref, alpha_ref, bias_ref, o_ref, *, eps, d_model):
    # Reductions in f32 regardless of input dtype.
    x = x_ref[...].astype(jnp.float32)                        # (tm, D)

    # Pass 1: mean.
    mean = jnp.sum(x, axis=-1, keepdims=True) * (1.0 / d_model)   # (tm, 1)

    # Pass 2 (over the already-resident VMEM tile, hidden under the HBM DMA):
    # centered, unbiased (N-1) variance.  Two-pass avoids the catastrophic
    # cancellation of the E[x^2] - mean^2 formula when |mean| >> std.
    centered = x - mean                                        # (tm, D)
    var = jnp.sum(centered * centered, axis=-1, keepdims=True) * (1.0 / (d_model - 1))
    std = jnp.sqrt(var)                                        # (tm, 1)

    # Exact per-row reciprocal.  It's a tiny (tm, 1) op and the kernel is
    # DMA-bound, so the approx EUP rcp buys nothing and costs accuracy.
    inv = 1.0 / (std + eps)                                    # (tm, 1)

    # alpha/bias arrive pre-cast to f32 from the wrapper (no per-step cast).
    alpha = alpha_ref[...]                                     # (1, D)
    bias = bias_ref[...]                                       # (1, D)

    # TODO(synk): on v6e/v7x with bf16 inputs, do this elementwise phase in
    # bf16 (keep only the reductions above in f32) to halve vreg/VMEM pressure.
    y = alpha * (centered * inv) + bias
    o_ref[...] = y.astype(o_ref.dtype)


def _vmem_capacity_bytes():
    """Per-TensorCore VMEM capacity; conservative fallback if unqueryable."""
    try:
        return int(pltpu.get_tpu_info().vmem_capacity_bytes)
    except Exception:
        return 64 * 1024 * 1024   # v7x floor; safe on v5e/v6e too


def _choose_block_rows(rows, d_model, in_itemsize, out_itemsize, vmem_cap):
    """Pick the largest row tile whose double-buffered in + out blocks plus the
    f32 compute temporaries fit comfortably inside the per-generation VMEM
    budget, while keeping the grid >= 2 steps so v7x's two TensorCores both
    get sharded work (and the pipeline has something to overlap)."""
    # Per row of block:  2x input buf + 2x output buf + ~2 f32 temporaries
    # (the upcast tile and the centered tile).
    per_row_bytes = d_model * (2 * in_itemsize + 2 * out_itemsize + 2 * 4)
    budget = int(vmem_cap * 0.45)            # headroom for compiler scratch
    br = max(8, budget // max(per_row_bytes, 1))

    rows_rounded = ((rows + 7) // 8) * 8
    if rows_rounded >= 16:
        # Keep at least 2 grid steps when the problem is big enough to split.
        br = min(br, max(8, rows_rounded // 2))
    br = min(br, rows_rounded)
    br = max(8, (br // 8) * 8)               # sublane multiple
    return int(br)


def layer_norm(x, alpha, bias, eps=1e-6, block_rows=None):
    """x: (..., d_model); alpha, bias: (d_model,)"""
    orig_shape = x.shape
    d_model = orig_shape[-1]
    x2d = x.reshape(-1, d_model)
    rows = x2d.shape[0]

    in_itemsize = x.dtype.itemsize
    out_itemsize = x.dtype.itemsize
    vmem_cap = _vmem_capacity_bytes()

    if block_rows is None:
        block_rows = _choose_block_rows(rows, d_model, in_itemsize,
                                        out_itemsize, vmem_cap)

    # Pre-cast params to the compute dtype once, outside the kernel.
    alpha2d = alpha.reshape(1, d_model).astype(jnp.float32)
    bias2d = bias.reshape(1, d_model).astype(jnp.float32)

    grid = (pl.cdiv(rows, block_rows),)
    kernel = functools.partial(_layernorm_kernel, eps=float(eps), d_model=d_model)

    # VMEM limit derived from the chosen tile (2x in + 2x out double buffers
    # + f32 temporaries + resident alpha/bias), capped under the per-TC cap.
    tile_elems = block_rows * d_model
    vmem_needed = (tile_elems * (2 * in_itemsize + 2 * out_itemsize + 2 * 4)
                   + 4 * d_model * 4)
    vmem_limit = min(int(vmem_needed * 1.5) + (4 << 20), int(vmem_cap * 0.9))
    vmem_limit = max(vmem_limit, 16 * 1024 * 1024)

    # Advisory cost: mem-bound region (read + write of x, tiny param reads).
    cost = pl.CostEstimate(
        flops=8 * rows * d_model,
        transcendentals=rows,                     # one sqrt per row
        bytes_accessed=rows * d_model * (in_itemsize + out_itemsize)
        + 2 * d_model * 4,
    )

    # TODO(synk): for real workloads with d_model < 128, repack several rows
    # into a lane-dense (>=128) last dim to avoid masked vst.msk partial stores.
    out = pl.pallas_call(
        kernel,
        out_shape=jax.ShapeDtypeStruct((rows, d_model), x.dtype),
        grid_spec=pltpu.PrefetchScalarGridSpec(
            num_scalar_prefetch=0,
            grid=grid,
            in_specs=[
                pl.BlockSpec((block_rows, d_model), lambda i: (i, 0)),
                pl.BlockSpec((1, d_model), lambda i: (0, 0)),
                pl.BlockSpec((1, d_model), lambda i: (0, 0)),
            ],
            out_specs=pl.BlockSpec((block_rows, d_model), lambda i: (i, 0)),
        ),
        compiler_params=pltpu.CompilerParams(
            dimension_semantics=("parallel",),    # shard rows across v7x's 2 TCs
            vmem_limit_bytes=vmem_limit,
        ),
        cost_estimate=cost,
    )(x2d, alpha2d, bias2d)

    return out.reshape(orig_shape)


if __name__ == "__main__":
    key = jax.random.PRNGKey(0)
    batch, seq, d_model = 2, 8, 32
    eps = 1e-6

    x = jax.random.normal(key, (batch, seq, d_model), dtype=jnp.float32)

    # nn.Parameter(torch.ones) / nn.Parameter(torch.zeros)
    alpha = jnp.ones((d_model,), dtype=jnp.float32)
    bias = jnp.zeros((d_model,), dtype=jnp.float32)

    y = layer_norm(x, alpha, bias, eps=eps)
    jax.block_until_ready(y)

    # Pure-JAX reference mirroring the torch module (unbiased std, eps on std).
    mean = jnp.mean(x, axis=-1, keepdims=True)
    std = jnp.sqrt(jnp.sum((x - mean) ** 2, axis=-1, keepdims=True) / (d_model - 1))
    ref = alpha * (x - mean) / (std + eps) + bias

    assert jnp.allclose(y, ref, atol=1e-5, rtol=1e-5), "mismatch vs reference"

    print("KERNEL_OK")
</pallas_src>

<mosaic_0001>
module attributes {stable_mosaic.version = 11 : i64} {
  func.func @_layernorm_kernel(%arg0: i32, %arg1: memref<8x32xf32, #tpu.memory_space<vmem>>, %arg2: memref<1x32xf32, #tpu.memory_space<vmem>>, %arg3: memref<1x32xf32, #tpu.memory_space<vmem>>, %arg4: memref<8x32xf32, #tpu.memory_space<vmem>>) attributes {dimension_semantics = [#tpu.dimension_semantics<parallel>], iteration_bounds = array<i64: 2>, scalar_prefetch = 0 : i64, scratch_operands = 0 : i64, tpu.core_type = #tpu.core_type<tc>, window_params = [{transform_indices = @transform_0, window_bounds = array<i64: 8, 32>}, {pipeline_mode = #tpu.pipeline_mode<synchronous>, transform_indices = @transform_1, window_bounds = array<i64: 1, 32>}, {pipeline_mode = #tpu.pipeline_mode<synchronous>, transform_indices = @transform_2, window_bounds = array<i64: 1, 32>}, {transform_indices = @transform_3, window_bounds = array<i64: 8, 32>}]} {
    %c0 = arith.constant 0 : index
    %c0_0 = arith.constant 0 : index
    %0 = vector.load %arg1[%c0, %c0_0] : memref<8x32xf32, #tpu.memory_space<vmem>>, vector<8x32xf32>
    %cst = arith.constant dense<0.000000e+00> : vector<8xf32>
    %1 = vector.multi_reduction <add>, %0, %cst [1] : vector<8x32xf32> to vector<8xf32>
    %2 = vector.shape_cast %1 : vector<8xf32> to vector<8x1xf32>
    %cst_1 = arith.constant 3.125000e-02 : f32
    %3 = vector.broadcast %cst_1 : f32 to vector<8x1xf32>
    %4 = arith.mulf %2, %3 : vector<8x1xf32>
    %5 = vector.broadcast %4 : vector<8x1xf32> to vector<8x32xf32>
    %6 = arith.subf %0, %5 : vector<8x32xf32>
    %7 = arith.mulf %6, %6 : vector<8x32xf32>
    %cst_2 = arith.constant dense<0.000000e+00> : vector<8xf32>
    %8 = vector.multi_reduction <add>, %7, %cst_2 [1] : vector<8x32xf32> to vector<8xf32>
    %9 = vector.shape_cast %8 : vector<8xf32> to vector<8x1xf32>
    %cst_3 = arith.constant 0.0322580636 : f32
    %10 = vector.broadcast %cst_3 : f32 to vector<8x1xf32>
    %11 = arith.mulf %9, %10 : vector<8x1xf32>
    %12 = math.sqrt %11 : vector<8x1xf32>
    %cst_4 = arith.constant 9.99999997E-7 : f32
    %13 = vector.broadcast %cst_4 : f32 to vector<8x1xf32>
    %14 = arith.addf %12, %13 : vector<8x1xf32>
    %cst_5 = arith.constant 1.000000e+00 : f32
    %15 = vector.broadcast %cst_5 : f32 to vector<8x1xf32>
    %16 = arith.divf %15, %14 : vector<8x1xf32>
    %c0_6 = arith.constant 0 : index
    %c0_7 = arith.constant 0 : index
    %17 = vector.load %arg2[%c0_6, %c0_7] : memref<1x32xf32, #tpu.memory_space<vmem>>, vector<1x32xf32>
    %c0_8 = arith.constant 0 : index
    %c0_9 = arith.constant 0 : index
    %18 = vector.load %arg3[%c0_8, %c0_9] : memref<1x32xf32, #tpu.memory_space<vmem>>, vector<1x32xf32>
    %19 = vector.broadcast %16 : vector<8x1xf32> to vector<8x32xf32>
    %20 = arith.mulf %6, %19 : vector<8x32xf32>
    %21 = vector.broadcast %17 : vector<1x32xf32> to vector<8x32xf32>
    %22 = arith.mulf %21, %20 : vector<8x32xf32>
    %23 = vector.broadcast %18 : vector<1x32xf32> to vector<8x32xf32>
    %24 = arith.addf %22, %23 : vector<8x32xf32>
    %c0_10 = arith.constant 0 : index
    %c0_11 = arith.constant 0 : index
    %25 = vector.load %arg4[%c0_10, %c0_11] : memref<8x32xf32, #tpu.memory_space<vmem>>, vector<8x32xf32>
    tpu.vector_store %arg4[%c0_10, %c0_11], %24 {strides = array<i32>} : memref<8x32xf32, #tpu.memory_space<vmem>>, vector<8x32xf32>,
    return
  }
  func.func @transform_0(%arg0: i32) -> (i32, i32) {
    %c0_i32 = arith.constant 0 : i32
    %c0_i32_0 = arith.constant 0 : i32
    return %arg0, %c0_i32 : i32, i32
  }
  func.func @transform_1(%arg0: i32) -> (i32, i32) {
    %c0_i32 = arith.constant 0 : i32
    %c0_i32_0 = arith.constant 0 : i32
    %c0_i32_1 = arith.constant 0 : i32
    return %c0_i32, %c0_i32_0 : i32, i32
  }
  func.func @transform_2(%arg0: i32) -> (i32, i32) {
    %c0_i32 = arith.constant 0 : i32
    %c0_i32_0 = arith.constant 0 : i32
    %c0_i32_1 = arith.constant 0 : i32
    return %c0_i32, %c0_i32_0 : i32, i32
  }
  func.func @transform_3(%arg0: i32) -> (i32, i32) {
    %c0_i32 = arith.constant 0 : i32
    %c0_i32_0 = arith.constant 0 : i32
    return %arg0, %c0_i32 : i32, i32
  }
}

</mosaic_0001>

<llo_original>
// kernel: tpu_custom_call.1
$region0: #{tpu_custom_call.1}
  #allocation0 [shape = 'u32[]', space=smem, size = 0x4, offset = 0x4, fixed_abs, tag = 'smem constant byte address 0x4 - core index']
  #allocation1 [shape = 'u32[144,128]{1,0:T(1,128)}', space=vmem, size = 0x12000, scoped, tag = 'internal scratch']
  %s0 = inlined_call_operand.hbm [shape: f32[16,32], index: 0, kind: input, shape index: {}]
  %s1 = inlined_call_operand.vmem [shape: f32[1,32], index: 1, kind: input, shape index: {}]
  %s2 = inlined_call_operand.vmem [shape: f32[1,32], index: 2, kind: input, shape index: {}]
  %s3 = inlined_call_operand.hbm [shape: f32[16,32], index: 3, kind: output, shape index: {}]
  %s4 = sld [smem:[#allocation0]]
  $region49: #{tpu_custom_call.1} parent=0
    _
  %s6 = ssub.s32 1, %s4
  %s7 = scalar_select 0, %s6, %s4
  $region1: #{tpu_custom_call.1} parent=0
    #allocation2 [shape = 'u8[8192]{0}', space=vmem, size = 0x2000, scoped, tag = 'input window, operand 0']
    #allocation3 [shape = 's32[2]{0}', space=sflag, size = 0x8, scoped, tag = 'scoped memory for tpu_custom_call.1']
    #allocation4 [shape = 's32[2]{0}', space=sflag, size = 0x8, scoped, tag = 'scoped memory for tpu_custom_call.1']
    #allocation5 [shape = 'u8[8192]{0}', space=vmem, size = 0x2000, scoped, tag = 'output window, operand 0']
    %8 = vsyncpa [#allocation3], 0
    %s9 = scalar_lea.sflag [#allocation3], 1
    %10 = vsyncpa %s9, 0
    %11 = vsyncpa [#allocation4], 0
    %s12 = scalar_lea.sflag [#allocation4], 1
    %13 = vsyncpa %s12, 0
    loop: start=0, step=1, limit=4
    $region2: #{tpu_custom_call.1} parent=1 // loop_pre_header
      _
    $region3: #{tpu_custom_call.1} parent=1 // loop_header
      %s15 = sphi 0, %s19
      %p16 = scmp.ge.s32.totalorder %s15, 4
      %s25 = sphi 0, %s27
      %s28 = sphi 0, %s25
      %s29 = sphi 0, %s28
      %s45 = sphi 0, %s29
      %s49 = sphi 0, %s49
      %s51 = sphi 0, %s49
      %s52 = sphi 0, %s51
      %s66 = sphi 0, %s52
      %s70 = sphi 0, %s70
      %s72 = sphi 0, %s70
      %s73 = sphi 0, %s72
      %s87 = sphi 0, %s73
      %s93 = sphi 0, %s95
      %s96 = sphi 0, %s93
      %s97 = sphi 0, %s96
      %s113 = sphi 0, %s97
    $region4: #{tpu_custom_call.1} parent=1 // loop_header_branch
      %18 = sbr.rel (%p16) target = $region8
    $region5: #{tpu_custom_call.1} parent=1 // loop_body
      %s20 = ssub.s32 %s15, 1
      %s21 = ssub.s32 %s15, 2
      %s22 = sadd.s32 %s15, 1
      %s23 = ssub.s32 %s15, %s22
      %p24 = scmp.eq.s32.totalorder %s23, 0
      %s26 = sadd.s32 %s25, 1
      %s27 = scalar_select %p24, %s25, %s26
      %p30 = pneg %p24
      %p31 = scmp.eq.s32.totalorder %s15, 1
      %p32 = por %p30, %p31
      %p33 = scmp.ne.s32.totalorder %s25, %s28
      %p34 = scmp.eq.s32.totalorder %s15, 0
      %p35 = por %p33, %p34
      %p36 = scmp.ne.s32.totalorder %s25, %s28
      %p37 = scmp.eq.s32.totalorder %s20, 1
      %p38 = por %p36, %p37
      %p39 = scmp.ne.s32.totalorder %s28, %s29
      %p40 = scmp.eq.s32.totalorder %s20, 0
      %p41 = por %p39, %p40
      %p42 = scmp.ne.s32.totalorder %s28, %s29
      %p43 = scmp.eq.s32.totalorder %s21, 1
      %p44 = por %p42, %p43
      %p46 = scmp.ne.s32.totalorder %s29, %s45
      %p47 = scmp.eq.s32.totalorder %s21, 0
      %p48 = por %p46, %p47
      %s50 = sadd.s32 %s49, 1
      %p53 = scmp.eq.s32.totalorder %s15, 1
      %p54 = scmp.ne.s32.totalorder %s49, %s51
      %p55 = scmp.eq.s32.totalorder %s15, 0
      %p56 = por %p54, %p55
      %p57 = scmp.ne.s32.totalorder %s49, %s51
      %p58 = scmp.eq.s32.totalorder %s20, 1
      %p59 = por %p57, %p58
      %p60 = scmp.ne.s32.totalorder %s51, %s52
      %p61 = scmp.eq.s32.totalorder %s20, 0
      %p62 = por %p60, %p61
      %p63 = scmp.ne.s32.totalorder %s51, %s52
      %p64 = scmp.eq.s32.totalorder %s21, 1
      %p65 = por %p63, %p64
      %p67 = scmp.ne.s32.totalorder %s52, %s66
      %p68 = scmp.eq.s32.totalorder %s21, 0
      %p69 = por %p67, %p68
      %s71 = sadd.s32 %s70, 1
      %p74 = scmp.eq.s32.totalorder %s15, 1
      %p75 = scmp.ne.s32.totalorder %s70, %s72
      %p76 = scmp.eq.s32.totalorder %s15, 0
      %p77 = por %p75, %p76
      %p78 = scmp.ne.s32.totalorder %s70, %s72
      %p79 = scmp.eq.s32.totalorder %s20, 1
      %p80 = por %p78, %p79
      %p81 = scmp.ne.s32.totalorder %s72, %s73
      %p82 = scmp.eq.s32.totalorder %s20, 0
      %p83 = por %p81, %p82
      %p84 = scmp.ne.s32.totalorder %s72, %s73
      %p85 = scmp.eq.s32.totalorder %s21, 1
      %p86 = por %p84, %p85
      %p88 = scmp.ne.s32.totalorder %s73, %s87
      %p89 = scmp.eq.s32.totalorder %s21, 0
      %p90 = por %p88, %p89
      %s91 = ssub.s32 %s15, %s22
      %p92 = scmp.eq.s32.totalorder %s91, 0
      %s94 = sadd.s32 %s93, 1
      %s95 = scalar_select %p92, %s93, %s94
      %p98 = pneg %p92
      %p99 = scmp.eq.s32.totalorder %s15, 1
      %p100 = por %p98, %p99
      %p101 = scmp.ne.s32.totalorder %s93, %s96
      %p102 = scmp.eq.s32.totalorder %s15, 0
      %p103 = por %p101, %p102
      %p104 = scmp.ne.s32.totalorder %s93, %s96
      %p105 = scmp.eq.s32.totalorder %s20, 1
      %p106 = por %p104, %p105
      %p107 = scmp.ne.s32.totalorder %s96, %s97
      %p108 = scmp.eq.s32.totalorder %s20, 0
      %p109 = por %p107, %p108
      %p110 = scmp.ne.s32.totalorder %s96, %s97
      %p111 = scmp.eq.s32.totalorder %s21, 1
      %p112 = por %p110, %p111
      %p114 = scmp.ne.s32.totalorder %s97, %s113
      %p115 = scmp.eq.s32.totalorder %s21, 0
      %p116 = por %p114, %p115
      %p117 = scmp.le.s32.totalorder 1, %s15
      %p118 = scmp.lt.s32.totalorder %s15, 3
      %p119 = pnand %p117, %p118
      %p120 = pneg %p119
      // Predicated region
      $region9: #{tpu_custom_call.1} parent=5 // pred_check
        _
      $region10: #{tpu_custom_call.1} parent=5 // pred_check_branch
        %122 = sbr.rel (%p119) target = $region12
      $region11: #{tpu_custom_call.1} parent=5 // pred_region
        %s123 = ssub.s32 %s15, 1
        // Predicated region
        $region13: #{tpu_custom_call.1} parent=11 // pred_check
          %p124 = pneg %p62
        $region14: #{tpu_custom_call.1} parent=11 // pred_check_branch
          %126 = sbr.rel (%p124) target = $region16
        $region15: #{tpu_custom_call.1} parent=11 // pred_region
          _
        $region16: #{tpu_custom_call.1} parent=11 // pred_fallthru
          _
        // Predicated region
        $region17: #{tpu_custom_call.1} parent=11 // pred_check
          %p127 = pneg %p83
        $region18: #{tpu_custom_call.1} parent=11 // pred_check_branch
          %129 = sbr.rel (%p127) target = $region20
        $region19: #{tpu_custom_call.1} parent=11 // pred_region
          _
        $region20: #{tpu_custom_call.1} parent=11 // pred_fallthru
          _
      $region12: #{tpu_custom_call.1} parent=5 // pred_fallthru
        _
      %p130 = scmp.lt.s32.totalorder %s15, 2
      // Predicated region
      $region21: #{tpu_custom_call.1} parent=5 // pred_check
        %p131 = pneg %p130
      $region22: #{tpu_custom_call.1} parent=5 // pred_check_branch
        %133 = sbr.rel (%p131) target = $region24
      $region23: #{tpu_custom_call.1} parent=5 // pred_region
        // Predicated region
        $region25: #{tpu_custom_call.1} parent=23 // pred_check
          %p134 = pneg %p35
        $region26: #{tpu_custom_call.1} parent=23 // pred_check_branch
          %136 = sbr.rel (%p134) target = $region28
        $region27: #{tpu_custom_call.1} parent=23 // pred_region
          %s137 = sand.u32 %s25, 1
          %s138 = scalar_lea.sflag [#allocation3], %s137
          %s139 = sand.u32 %s25, 1
          %s140 = smul.addr %s139, 8
          %s141 = scalar_lea.vmem [#allocation2], %s140
          %s143 = ssub.s32 128, 128
          %144 = vsyncadd %s138, %s143
          %s145 = smul.addr %s15, 128
          %s146 = scalar_lea.hbm %s0, %s145
          %s148 = sshll.u32 %s141, 4
          %s149 = int_to_ptr.vmem [resolvable:$true] %s148
          %151 = dma.hbm_to_vmem [thread:$0]  %s146, 128, %s149, %s138
        $region28: #{tpu_custom_call.1} parent=23 // pred_fallthru
          _
      $region24: #{tpu_custom_call.1} parent=5 // pred_fallthru
        _
      %p152 = scmp.le.s32.totalorder 1, %s15
      %p153 = scmp.lt.s32.totalorder %s15, 3
      %p154 = pnand %p152, %p153
      %p155 = pneg %p154
      // Predicated region
      $region29: #{tpu_custom_call.1} parent=5 // pred_check
        _
      $region30: #{tpu_custom_call.1} parent=5 // pred_check_branch
        %157 = sbr.rel (%p154) target = $region32
      $region31: #{tpu_custom_call.1} parent=5 // pred_region
        %s158 = ssub.s32 %s15, 1
        %s159 = sand.u32 %s28, 1
        %s160 = scalar_lea.sflag [#allocation3], %s159
        %s161 = sand.u32 %s28, 1
        %s162 = smul.addr %s161, 8
        %s163 = scalar_lea.vmem [#allocation2], %s162
        // Predicated region
        $region33: #{tpu_custom_call.1} parent=31 // pred_check
          %p164 = pneg %p41
        $region34: #{tpu_custom_call.1} parent=31 // pred_check_branch
          %166 = sbr.rel (%p164) target = $region36
        $region35: #{tpu_custom_call.1} parent=31 // pred_region
          %167 = dma.done %s160, 128
        $region36: #{tpu_custom_call.1} parent=31 // pred_fallthru
          _
        %s168 = sand.u32 %s28, 1
        %s169 = scalar_lea.sflag [#allocation3], %s168
        %s170 = sand.u32 %s28, 1
        %s171 = smul.addr %s170, 8
        %s172 = scalar_lea.vmem [#allocation2], %s171
        %p173 = pneg %p41
        %p174 = pneg %p38
        %p175 = pneg %p62
        %p176 = pneg %p59
        %p177 = pneg %p83
        %p178 = pneg %p80
        %p179 = pneg %p109
        %p180 = pneg %p106
        %s181 = sand.u32 %s96, 1
        %s182 = scalar_lea.sflag [#allocation4], %s181
        %s183 = sand.u32 %s96, 1
        %s184 = smul.addr %s183, 8
        %s185 = scalar_lea.vmem [#allocation5], %s184
        %v186 = vld [vmem:[%s163] sm:$0xff]
        %vm187 = vcmask 261120
        %v188 = vsel %vm187, %v186, 0.0
        %189 = vadd.xlane.f32.xlu0 %v188
        %v190 = vpop.xlane.xlu0 %189
        %v191 = vmul.f32 %v190, 0.03125
        %v192 = vsub.f32 %v186, %v191
        %v193 = vmul.f32 %v192, %v192
        %v194 = vsel %vm187, %v193, 0.0
        %195 = vadd.xlane.f32.xlu0 %v194
        %v196 = vpop.xlane.xlu0 %195
        %v197 = vmul.f32 %v196, 0.032258064
        %v198 = vrsqrt.pop %v197
        %v199 = vmul.f32 %v197, %v198
        %vm200 = vcmp.eq.f32.partialorder %v197, inf
        %v201 = vsel %vm200, %v197, %v199
        %vm202 = vcmp.eq.f32.partialorder %v197, 0.0
        %v203 = vand.u32 %v197, 2147483648
        %v204 = vsel %vm202, %v203, %v201
        %v205 = vadd.f32 %v204, 1e-06
        %v206 = vrcp.pop %v205
        %v207 = vmul.f32 1.0, %v206
        %v208 = vld [vmem:[%s1] sm:$0x1]
        %v209 = vld [vmem:[%s2] sm:$0x1]
        %v210 = vmul.f32 %v192, %v207
        %v212 = vlaneseq
        %v213 = vshrl.u32 %v212, 7
        %v214 = vsub.s32 0, %v213
        %v215 = vrot.slane %v208, %v214
        %v217 = vmul.f32 %v215, %v210
        %v219 = vlaneseq
        %v220 = vshrl.u32 %v219, 7
        %v221 = vsub.s32 0, %v220
        %v222 = vrot.slane %v209, %v221
        %v224 = vadd.f32 %v217, %v222
        %225 = vst.msk [vmem:[%s185] sm:$0xff] %vm187, %v224
        %s226 = sand.u32 %s96, 1
        %s227 = scalar_lea.sflag [#allocation4], %s226
        %s228 = sand.u32 %s96, 1
        %s229 = smul.addr %s228, 8
        %s230 = scalar_lea.vmem [#allocation5], %s229
        // Predicated region
        $region37: #{tpu_custom_call.1} parent=31 // pred_check
          %p231 = pneg %p106
        $region38: #{tpu_custom_call.1} parent=31 // pred_check_branch
          %233 = sbr.rel (%p231) target = $region40
        $region39: #{tpu_custom_call.1} parent=31 // pred_region
          %s235 = ssub.s32 128, 128
          %236 = vsyncadd %s227, %s235
          %s237 = smul.addr %s20, 128
          %s238 = scalar_lea.hbm %s3, %s237
          %s240 = sshll.u32 %s230, 4
          %s241 = int_to_ptr.vmem [resolvable:$true] %s240
          %243 = dma.vmem_to_hbm [thread:$0]  %s241, 128, %s238, %s227
        $region40: #{tpu_custom_call.1} parent=31 // pred_fallthru
          _
      $region32: #{tpu_custom_call.1} parent=5 // pred_fallthru
        _
      %p244 = scmp.le.s32.totalorder 2, %s15
      // Predicated region
      $region41: #{tpu_custom_call.1} parent=5 // pred_check
        %p245 = pneg %p244
      $region42: #{tpu_custom_call.1} parent=5 // pred_check_branch
        %247 = sbr.rel (%p245) target = $region44
      $region43: #{tpu_custom_call.1} parent=5 // pred_region
        %s248 = ssub.s32 %s15, 2
        // Predicated region
        $region45: #{tpu_custom_call.1} parent=43 // pred_check
          %p249 = pneg %p112
        $region46: #{tpu_custom_call.1} parent=43 // pred_check_branch
          %251 = sbr.rel (%p249) target = $region48
        $region47: #{tpu_custom_call.1} parent=43 // pred_region
          %s252 = sand.u32 %s97, 1
          %s253 = scalar_lea.sflag [#allocation4], %s252
          %s254 = sand.u32 %s97, 1
          %s255 = smul.addr %s254, 8
          %s256 = scalar_lea.vmem [#allocation5], %s255
          %257 = dma.done %s253, 128
        $region48: #{tpu_custom_call.1} parent=43 // pred_fallthru
          _
      $region44: #{tpu_custom_call.1} parent=5 // pred_fallthru
        _
    $region6: #{tpu_custom_call.1} parent=1 // loop_footer
      %s19 = sadd.s32 1, %s15
    $region7: #{tpu_custom_call.1} parent=1 // loop_footer_branch
      %14 = sbr.rel target = $region3
    $region8: #{tpu_custom_call.1} parent=1 // loop_exit
      _
    %258 = vsyncpa [#allocation3], 1
    %s259 = scalar_lea.sflag [#allocation3], 1
    %260 = vsyncpa %s259, 1
    %261 = vsyncpa [#allocation4], 1
    %s262 = scalar_lea.sflag [#allocation4], 1
    %263 = vsyncpa %s262, 1

</llo_original>
